<compile_context>
chip_gen: v6e
topology: v6e:2x2x1
jax: 0.10.0
libtpu: 0.0.40
codegen_flags: <defaults>
</compile_context>

<pallas_src>
import functools

import jax
import jax.numpy as jnp
from jax import lax
from jax.experimental import pallas as pl
from jax.experimental.pallas import tpu as pltpu


# bf16 is MXU-native on v5e/v6e/v7x; accumulation stays f32.  Set to
# jnp.float32 only if bit-exact f32 matmuls are required.
MATMUL_DTYPE = jnp.bfloat16


def _basic_block_kernel(x_ref, m_ref, w1_ref, b1_ref, w2_ref, b2_ref, o_ref,
                        stack_ref, *, C, W, matmul_dtype):
    """One batch element per grid step; spatial axis (H*W) on lanes.

    x_ref     : (1, C, H*W)  input activation, f32 (also the residual)
    m_ref     : (9, 1, H*W)  precomputed border-validity mask per tap, f32
    w1_ref    : (P, 9*C)     conv1 weight (BN1 scale folded), tap-major, bf16
    b1_ref    : (P, 1)       folded BN1 bias, f32
    w2_ref    : (P, 9*P)     conv2 weight (BN2 scale folded), tap-major, bf16
    b2_ref    : (P, 1)       folded BN2 bias, f32
    o_ref     : (1, P, H*W)  output, f32
    stack_ref : (9*C, H*W)   VMEM scratch for the im2col-style tap stack, f32
    """
    x = x_ref[0]                                     # (C, L) f32

    # Tap flat-shifts; tap index k = (dh+1)*3 + (dw+1) matches the weight and
    # mask layouts produced outside the kernel.
    shifts = tuple(dh * W + dw for dh in (-1, 0, 1) for dw in (-1, 0, 1))

    def conv3x3(inp, w_ref, b_ref):
        # Build the (9*C, L) tap stack: each tap is the flat activation rolled
        # by dh*W+dw, with the precomputed mask realising the zero padding
        # (and killing the wrap-around of the roll at image borders).
        for k, d in enumerate(shifts):
            tap = inp if d == 0 else jnp.roll(inp, -d, axis=-1) * m_ref[k]
            stack_ref[k * C:(k + 1) * C, :] = tap
        stacked = stack_ref[...].astype(matmul_dtype)     # one cast per conv
        # Single MXU dot, contraction depth 9*C, f32 accumulation.
        acc = jnp.dot(w_ref[...], stacked,
                      preferred_element_type=jnp.float32)  # (P, L) f32
        return acc + b_ref[...]

    out1 = jnp.maximum(conv3x3(x, w1_ref, b1_ref), 0.0)    # conv1+BN1+ReLU
    out2 = conv3x3(out1, w2_ref, b2_ref)                   # conv2+BN2
    o_ref[0] = jnp.maximum(out2 + x, 0.0)                  # +residual, ReLU


def fold_basic_block_params(params, eps=1e-5, matmul_dtype=MATMUL_DTYPE):
    """One-time preprocessing (outside the hot path): fold the BN scale into
    the conv weights, lay the weights out tap-major as (P, 9*Cin) to match the
    in-kernel tap stack, store them in the matmul dtype, fold the BN bias."""
    P, Cin = params["w1"].shape[0], params["w1"].shape[1]
    s1 = params["g1"] / jnp.sqrt(params["v1"] + eps)              # (P,)
    s2 = params["g2"] / jnp.sqrt(params["v2"] + eps)
    w1 = params["w1"] * s1[:, None, None, None]                   # (P, Cin, 3, 3)
    w2 = params["w2"] * s2[:, None, None, None]                   # (P, P, 3, 3)
    # w[p, (kh*3+kw)*Cin + c] <- w[p, c, kh, kw]
    w1 = jnp.transpose(w1, (0, 2, 3, 1)).reshape(P, 9 * Cin).astype(matmul_dtype)
    w2 = jnp.transpose(w2, (0, 2, 3, 1)).reshape(P, 9 * P).astype(matmul_dtype)
    b1 = (params["b1"] - params["m1"] * s1).reshape(P, 1).astype(jnp.float32)
    b2 = (params["b2"] - params["m2"] * s2).reshape(P, 1).astype(jnp.float32)
    return w1, b1, w2, b2


def _make_tap_masks(H, W, dtype=jnp.float32):
    """Per-tap border-validity masks, shape (9, 1, H*W).  Computed once
    outside the kernel (constant-folded under jit); the `% H` keeps the
    construction valid if several images are later merged into the lane axis."""
    L = H * W
    q = jnp.arange(L, dtype=jnp.int32)
    wi = q % W
    hi = (q // W) % H
    masks = []
    for dh in (-1, 0, 1):
        for dw in (-1, 0, 1):
            valid = ((hi + dh >= 0) & (hi + dh < H) &
                     (wi + dw >= 0) & (wi + dw < W))
            masks.append(valid.astype(dtype))
    return jnp.stack(masks, axis=0).reshape(9, 1, L)


def basic_block_forward(x_nchw, folded):
    """x_nchw: (N, C, H, W) float32 -> (N, P, H, W) float32."""
    N, C, H, W = x_nchw.shape
    w1, b1, w2, b2 = folded
    P = w1.shape[0]
    assert C == P, "downsample=None requires inplanes == planes"
    L = H * W

    # Free: NCHW memory order is already (C, H*W)-major, no transpose / pad.
    x = x_nchw.reshape(N, C, L)
    masks = _make_tap_masks(H, W)

    kernel = functools.partial(_basic_block_kernel, C=C, W=W,
                               matmul_dtype=MATMUL_DTYPE)

    out = pl.pallas_call(
        kernel,
        out_shape=jax.ShapeDtypeStruct((N, P, L), jnp.float32),
        grid_spec=pltpu.PrefetchScalarGridSpec(
            num_scalar_prefetch=0,
            grid=(N,),
            in_specs=[
                pl.BlockSpec((1, C, L), lambda n: (n, 0, 0)),       # x
                pl.BlockSpec((9, 1, L), lambda n: (0, 0, 0)),       # tap masks
                pl.BlockSpec((P, 9 * C), lambda n: (0, 0)),         # w1 (bf16)
                pl.BlockSpec((P, 1), lambda n: (0, 0)),             # b1
                pl.BlockSpec((P, 9 * P), lambda n: (0, 0)),         # w2 (bf16)
                pl.BlockSpec((P, 1), lambda n: (0, 0)),             # b2
            ],
            out_specs=pl.BlockSpec((1, P, L), lambda n: (n, 0, 0)),
            scratch_shapes=[pltpu.VMEM((9 * C, L), jnp.float32)],
        ),
        compiler_params=pltpu.CompilerParams(
            dimension_semantics=("parallel",),
            vmem_limit_bytes=32 * 1024 * 1024),
    )(x, masks, w1, b1, w2, b2)

    return out.reshape(N, P, H, W)


# ---------------------------------------------------------------------------
# Pure-JAX reference (NCHW, same semantics as PyTorch eval-mode BasicBlock)
# ---------------------------------------------------------------------------
def basic_block_reference(x, params, eps=1e-5):
    def conv(x, w):
        return lax.conv_general_dilated(
            x, w, window_strides=(1, 1), padding=((1, 1), (1, 1)),
            dimension_numbers=("NCHW", "OIHW", "NCHW"))

    def bn(x, g, b, m, v):
        g = g[None, :, None, None]
        b = b[None, :, None, None]
        m = m[None, :, None, None]
        v = v[None, :, None, None]
        return (x - m) / jnp.sqrt(v + eps) * g + b

    out = conv(x, params["w1"])
    out = jnp.maximum(bn(out, params["g1"], params["b1"],
                         params["m1"], params["v1"]), 0.0)
    out = conv(out, params["w2"])
    out = bn(out, params["g2"], params["b2"], params["m2"], params["v2"])
    return jnp.maximum(out + x, 0.0)


if __name__ == "__main__":
    # Small shapes: batch=2, inplanes=planes=4, spatial=16x16
    N, C, H, W = 2, 4, 16, 16
    key = jax.random.PRNGKey(0)
    ks = jax.random.split(key, 8)

    x = jax.random.normal(ks[0], (N, C, H, W), dtype=jnp.float32)

    params = {
        # conv weights in PyTorch OIHW layout, no bias (conv3x3 bias=False)
        "w1": jax.random.normal(ks[1], (C, C, 3, 3), jnp.float32) * 0.2,
        "w2": jax.random.normal(ks[2], (C, C, 3, 3), jnp.float32) * 0.2,
        # BatchNorm parameters / running stats (deterministic, non-trivial)
        "g1": 1.0 + 0.1 * jax.random.normal(ks[3], (C,), jnp.float32),
        "b1": 0.1 * jax.random.normal(ks[4], (C,), jnp.float32),
        "m1": 0.05 * jax.random.normal(ks[5], (C,), jnp.float32),
        "v1": 1.0 + 0.1 * jnp.abs(jax.random.normal(ks[6], (C,), jnp.float32)),
        "g2": jnp.ones((C,), jnp.float32),
        "b2": jnp.zeros((C,), jnp.float32),
        "m2": 0.05 * jax.random.normal(ks[7], (C,), jnp.float32),
        "v2": jnp.ones((C,), jnp.float32),
    }

    # One-time weight/BN preprocessing (hoisted out of the per-call hot path).
    folded = jax.tree_util.tree_map(jax.block_until_ready,
                                    fold_basic_block_params(params))

    fwd = jax.jit(basic_block_forward)
    out = jax.block_until_ready(fwd(x, folded))

    ref = jax.block_until_ready(basic_block_reference(x, params))
    assert out.shape == (N, C, H, W)
    # bf16 matmuls (f32 accumulation): tolerance loosened vs the pure-f32 path.
    assert jnp.allclose(out, ref, atol=5e-2, rtol=5e-2), (
        float(jnp.max(jnp.abs(out - ref))))

    print("KERNEL_OK")
</pallas_src>

<mosaic_0001>
module attributes {stable_mosaic.version = 11 : i64} {
  func.func @_basic_block_kernel(%arg0: i32, %arg1: memref<1x4x256xf32, #tpu.memory_space<vmem>>, %arg2: memref<9x1x256xf32, #tpu.memory_space<vmem>>, %arg3: memref<4x36xbf16, #tpu.memory_space<vmem>>, %arg4: memref<4x1xf32, #tpu.memory_space<vmem>>, %arg5: memref<4x36xbf16, #tpu.memory_space<vmem>>, %arg6: memref<4x1xf32, #tpu.memory_space<vmem>>, %arg7: memref<1x4x256xf32, #tpu.memory_space<vmem>>, %arg8: memref<36x256xf32, #tpu.memory_space<vmem>>) attributes {dimension_semantics = [#tpu.dimension_semantics<parallel>], iteration_bounds = array<i64: 2>, scalar_prefetch = 0 : i64, scratch_operands = 1 : i64, tpu.core_type = #tpu.core_type<tc>, window_params = [{transform_indices = @transform_0, window_bounds = array<i64: 1, 4, 256>}, {pipeline_mode = #tpu.pipeline_mode<synchronous>, transform_indices = @transform_1, window_bounds = array<i64: 9, 1, 256>}, {pipeline_mode = #tpu.pipeline_mode<synchronous>, transform_indices = @transform_2, window_bounds = array<i64: 4, 36>}, {pipeline_mode = #tpu.pipeline_mode<synchronous>, transform_indices = @transform_3, window_bounds = array<i64: 4, 1>}, {pipeline_mode = #tpu.pipeline_mode<synchronous>, transform_indices = @transform_4, window_bounds = array<i64: 4, 36>}, {pipeline_mode = #tpu.pipeline_mode<synchronous>, transform_indices = @transform_5, window_bounds = array<i64: 4, 1>}, {transform_indices = @transform_6, window_bounds = array<i64: 1, 4, 256>}]} {
    %c0 = arith.constant 0 : index
    %c0_0 = arith.constant 0 : index
    %c0_1 = arith.constant 0 : index
    %0 = vector.load %arg1[%c0, %c0_0, %c0_1] : memref<1x4x256xf32, #tpu.memory_space<vmem>>, vector<1x4x256xf32>
    %1 = vector.shape_cast %0 : vector<1x4x256xf32> to vector<4x256xf32>
    %2 = vector.extract_strided_slice %1 {offsets = [0, 239], sizes = [4, 17], strides = [1, 1]} : vector<4x256xf32> to vector<4x17xf32>
    %3 = vector.extract_strided_slice %1 {offsets = [0, 0], sizes = [4, 239], strides = [1, 1]} : vector<4x256xf32> to vector<4x239xf32>
    %4 = tpu.concatenate %2, %3 in 1 : vector<4x17xf32>, vector<4x239xf32> -> vector<4x256xf32>
    %c0_2 = arith.constant 0 : index
    %c0_3 = arith.constant 0 : index
    %c0_4 = arith.constant 0 : index
    %5 = vector.load %arg2[%c0_2, %c0_3, %c0_4] : memref<9x1x256xf32, #tpu.memory_space<vmem>>, vector<1x1x256xf32>
    %6 = vector.shape_cast %5 : vector<1x1x256xf32> to vector<1x256xf32>
    %7 = vector.broadcast %6 : vector<1x256xf32> to vector<4x256xf32>
    %8 = arith.mulf %4, %7 : vector<4x256xf32>
    %c0_5 = arith.constant 0 : index
    %c0_6 = arith.constant 0 : index
    %9 = vector.load %arg8[%c0_5, %c0_6] : memref<36x256xf32, #tpu.memory_space<vmem>>, vector<4x256xf32>
    tpu.vector_store %arg8[%c0_5, %c0_6], %8 {strides = array<i32>} : memref<36x256xf32, #tpu.memory_space<vmem>>, vector<4x256xf32>,
    %10 = vector.extract_strided_slice %1 {offsets = [0, 240], sizes = [4, 16], strides = [1, 1]} : vector<4x256xf32> to vector<4x16xf32>
    %11 = vector.extract_strided_slice %1 {offsets = [0, 0], sizes = [4, 240], strides = [1, 1]} : vector<4x256xf32> to vector<4x240xf32>
    %12 = tpu.concatenate %10, %11 in 1 : vector<4x16xf32>, vector<4x240xf32> -> vector<4x256xf32>
    %c1 = arith.constant 1 : index
    %c0_7 = arith.constant 0 : index
    %c0_8 = arith.constant 0 : index
    %13 = vector.load %arg2[%c1, %c0_7, %c0_8] : memref<9x1x256xf32, #tpu.memory_space<vmem>>, vector<1x1x256xf32>
    %14 = vector.shape_cast %13 : vector<1x1x256xf32> to vector<1x256xf32>
    %15 = vector.broadcast %14 : vector<1x256xf32> to vector<4x256xf32>
    %16 = arith.mulf %12, %15 : vector<4x256xf32>
    %c4 = arith.constant 4 : index
    %c0_9 = arith.constant 0 : index
    %17 = vector.load %arg8[%c4, %c0_9] : memref<36x256xf32, #tpu.memory_space<vmem>>, vector<4x256xf32>
    tpu.vector_store %arg8[%c4, %c0_9], %16 {strides = array<i32>} : memref<36x256xf32, #tpu.memory_space<vmem>>, vector<4x256xf32>,
    %18 = vector.extract_strided_slice %1 {offsets = [0, 241], sizes = [4, 15], strides = [1, 1]} : vector<4x256xf32> to vector<4x15xf32>
    %19 = vector.extract_strided_slice %1 {offsets = [0, 0], sizes = [4, 241], strides = [1, 1]} : vector<4x256xf32> to vector<4x241xf32>
    %20 = tpu.concatenate %18, %19 in 1 : vector<4x15xf32>, vector<4x241xf32> -> vector<4x256xf32>
    %c2 = arith.constant 2 : index
    %c0_10 = arith.constant 0 : index
    %c0_11 = arith.constant 0 : index
    %21 = vector.load %arg2[%c2, %c0_10, %c0_11] : memref<9x1x256xf32, #tpu.memory_space<vmem>>, vector<1x1x256xf32>
    %22 = vector.shape_cast %21 : vector<1x1x256xf32> to vector<1x256xf32>
    %23 = vector.broadcast %22 : vector<1x256xf32> to vector<4x256xf32>
    %24 = arith.mulf %20, %23 : vector<4x256xf32>
    %c8 = arith.constant 8 : index
    %c0_12 = arith.constant 0 : index
    %25 = vector.load %arg8[%c8, %c0_12] : memref<36x256xf32, #tpu.memory_space<vmem>>, vector<4x256xf32>
    tpu.vector_store %arg8[%c8, %c0_12], %24 {strides = array<i32>} : memref<36x256xf32, #tpu.memory_space<vmem>>, vector<4x256xf32>,
    %26 = vector.extract_strided_slice %1 {offsets = [0, 255], sizes = [4, 1], strides = [1, 1]} : vector<4x256xf32> to vector<4x1xf32>
    %27 = vector.extract_strided_slice %1 {offsets = [0, 0], sizes = [4, 255], strides = [1, 1]} : vector<4x256xf32> to vector<4x255xf32>
    %28 = tpu.concatenate %26, %27 in 1 : vector<4x1xf32>, vector<4x255xf32> -> vector<4x256xf32>
    %c3 = arith.constant 3 : index
    %c0_13 = arith.constant 0 : index
    %c0_14 = arith.constant 0 : index
    %29 = vector.load %arg2[%c3, %c0_13, %c0_14] : memref<9x1x256xf32, #tpu.memory_space<vmem>>, vector<1x1x256xf32>
    %30 = vector.shape_cast %29 : vector<1x1x256xf32> to vector<1x256xf32>
    %31 = vector.broadcast %30 : vector<1x256xf32> to vector<4x256xf32>
    %32 = arith.mulf %28, %31 : vector<4x256xf32>
    %c12 = arith.constant 12 : index
    %c0_15 = arith.constant 0 : index
    %33 = vector.load %arg8[%c12, %c0_15] : memref<36x256xf32, #tpu.memory_space<vmem>>, vector<4x256xf32>
    tpu.vector_store %arg8[%c12, %c0_15], %32 {strides = array<i32>} : memref<36x256xf32, #tpu.memory_space<vmem>>, vector<4x256xf32>,
    %c16 = arith.constant 16 : index
    %c0_16 = arith.constant 0 : index
    %34 = vector.load %arg8[%c16, %c0_16] : memref<36x256xf32, #tpu.memory_space<vmem>>, vector<4x256xf32>
    tpu.vector_store %arg8[%c16, %c0_16], %1 {strides = array<i32>} : memref<36x256xf32, #tpu.memory_space<vmem>>, vector<4x256xf32>,
    %35 = vector.extract_strided_slice %1 {offsets = [0, 1], sizes = [4, 255], strides = [1, 1]} : vector<4x256xf32> to vector<4x255xf32>
    %36 = vector.extract_strided_slice %1 {offsets = [0, 0], sizes = [4, 1], strides = [1, 1]} : vector<4x256xf32> to vector<4x1xf32>
    %37 = tpu.concatenate %35, %36 in 1 : vector<4x255xf32>, vector<4x1xf32> -> vector<4x256xf32>
    %c5 = arith.constant 5 : index
    %c0_17 = arith.constant 0 : index
    %c0_18 = arith.constant 0 : index
    %38 = vector.load %arg2[%c5, %c0_17, %c0_18] : memref<9x1x256xf32, #tpu.memory_space<vmem>>, vector<1x1x256xf32>
    %39 = vector.shape_cast %38 : vector<1x1x256xf32> to vector<1x256xf32>
    %40 = vector.broadcast %39 : vector<1x256xf32> to vector<4x256xf32>
    %41 = arith.mulf %37, %40 : vector<4x256xf32>
    %c20 = arith.constant 20 : index
    %c0_19 = arith.constant 0 : index
    %42 = vector.load %arg8[%c20, %c0_19] : memref<36x256xf32, #tpu.memory_space<vmem>>, vector<4x256xf32>
    tpu.vector_store %arg8[%c20, %c0_19], %41 {strides = array<i32>} : memref<36x256xf32, #tpu.memory_space<vmem>>, vector<4x256xf32>,
    %43 = vector.extract_strided_slice %1 {offsets = [0, 15], sizes = [4, 241], strides = [1, 1]} : vector<4x256xf32> to vector<4x241xf32>
    %44 = vector.extract_strided_slice %1 {offsets = [0, 0], sizes = [4, 15], strides = [1, 1]} : vector<4x256xf32> to vector<4x15xf32>
    %45 = tpu.concatenate %43, %44 in 1 : vector<4x241xf32>, vector<4x15xf32> -> vector<4x256xf32>
    %c6 = arith.constant 6 : index
    %c0_20 = arith.constant 0 : index
    %c0_21 = arith.constant 0 : index
    %46 = vector.load %arg2[%c6, %c0_20, %c0_21] : memref<9x1x256xf32, #tpu.memory_space<vmem>>, vector<1x1x256xf32>
    %47 = vector.shape_cast %46 : vector<1x1x256xf32> to vector<1x256xf32>
    %48 = vector.broadcast %47 : vector<1x256xf32> to vector<4x256xf32>
    %49 = arith.mulf %45, %48 : vector<4x256xf32>
    %c24 = arith.constant 24 : index
    %c0_22 = arith.constant 0 : index
    %50 = vector.load %arg8[%c24, %c0_22] : memref<36x256xf32, #tpu.memory_space<vmem>>, vector<4x256xf32>
    tpu.vector_store %arg8[%c24, %c0_22], %49 {strides = array<i32>} : memref<36x256xf32, #tpu.memory_space<vmem>>, vector<4x256xf32>,
    %51 = vector.extract_strided_slice %1 {offsets = [0, 16], sizes = [4, 240], strides = [1, 1]} : vector<4x256xf32> to vector<4x240xf32>
    %52 = vector.extract_strided_slice %1 {offsets = [0, 0], sizes = [4, 16], strides = [1, 1]} : vector<4x256xf32> to vector<4x16xf32>
    %53 = tpu.concatenate %51, %52 in 1 : vector<4x240xf32>, vector<4x16xf32> -> vector<4x256xf32>
    %c7 = arith.constant 7 : index
    %c0_23 = arith.constant 0 : index
    %c0_24 = arith.constant 0 : index
    %54 = vector.load %arg2[%c7, %c0_23, %c0_24] : memref<9x1x256xf32, #tpu.memory_space<vmem>>, vector<1x1x256xf32>
    %55 = vector.shape_cast %54 : vector<1x1x256xf32> to vector<1x256xf32>
    %56 = vector.broadcast %55 : vector<1x256xf32> to vector<4x256xf32>
    %57 = arith.mulf %53, %56 : vector<4x256xf32>
    %c28 = arith.constant 28 : index
    %c0_25 = arith.constant 0 : index
    %58 = vector.load %arg8[%c28, %c0_25] : memref<36x256xf32, #tpu.memory_space<vmem>>, vector<4x256xf32>
    tpu.vector_store %arg8[%c28, %c0_25], %57 {strides = array<i32>} : memref<36x256xf32, #tpu.memory_space<vmem>>, vector<4x256xf32>,
    %59 = vector.extract_strided_slice %1 {offsets = [0, 17], sizes = [4, 239], strides = [1, 1]} : vector<4x256xf32> to vector<4x239xf32>
    %60 = vector.extract_strided_slice %1 {offsets = [0, 0], sizes = [4, 17], strides = [1, 1]} : vector<4x256xf32> to vector<4x17xf32>
    %61 = tpu.concatenate %59, %60 in 1 : vector<4x239xf32>, vector<4x17xf32> -> vector<4x256xf32>
    %c8_26 = arith.constant 8 : index
    %c0_27 = arith.constant 0 : index
    %c0_28 = arith.constant 0 : index
    %62 = vector.load %arg2[%c8_26, %c0_27, %c0_28] : memref<9x1x256xf32, #tpu.memory_space<vmem>>, vector<1x1x256xf32>
    %63 = vector.shape_cast %62 : vector<1x1x256xf32> to vector<1x256xf32>
    %64 = vector.broadcast %63 : vector<1x256xf32> to vector<4x256xf32>
    %65 = arith.mulf %61, %64 : vector<4x256xf32>
    %c32 = arith.constant 32 : index
    %c0_29 = arith.constant 0 : index
    %66 = vector.load %arg8[%c32, %c0_29] : memref<36x256xf32, #tpu.memory_space<vmem>>, vector<4x256xf32>
    tpu.vector_store %arg8[%c32, %c0_29], %65 {strides = array<i32>} : memref<36x256xf32, #tpu.memory_space<vmem>>, vector<4x256xf32>,
    %c0_30 = arith.constant 0 : index
    %c0_31 = arith.constant 0 : index
    %67 = vector.load %arg8[%c0_30, %c0_31] : memref<36x256xf32, #tpu.memory_space<vmem>>, vector<36x256xf32>
    %68 = arith.truncf %67 : vector<36x256xf32> to vector<36x256xbf16>
    %c0_32 = arith.constant 0 : index
    %c0_33 = arith.constant 0 : index
    %69 = vector.load %arg3[%c0_32, %c0_33] : memref<4x36xbf16, #tpu.memory_space<vmem>>, vector<4x36xbf16>
    %cst = arith.constant dense<0.000000e+00> : vector<4x256xf32>
    %70 = tpu.matmul %69, %68, %cst {dimension_numbers = #tpu.dot_dimension_numbers<[1], [0], [0], [1], [0, 0, 1, 1], [], []>} : vector<4x36xbf16>, vector<36x256xbf16>, vector<4x256xf32> -> vector<4x256xf32>
    %c0_34 = arith.constant 0 : index
    %c0_35 = arith.constant 0 : index
    %71 = vector.load %arg4[%c0_34, %c0_35] : memref<4x1xf32, #tpu.memory_space<vmem>>, vector<4x1xf32>
    %72 = vector.broadcast %71 : vector<4x1xf32> to vector<4x256xf32>
    %73 = arith.addf %70, %72 : vector<4x256xf32>
    %cst_36 = arith.constant 0.000000e+00 : f32
    %74 = vector.broadcast %cst_36 : f32 to vector<4x256xf32>
    %75 = arith.maximumf %73, %74 : vector<4x256xf32>
    %76 = vector.extract_strided_slice %75 {offsets = [0, 239], sizes = [4, 17], strides = [1, 1]} : vector<4x256xf32> to vector<4x17xf32>
    %77 = vector.extract_strided_slice %75 {offsets = [0, 0], sizes = [4, 239], strides = [1, 1]} : vector<4x256xf32> to vector<4x239xf32>
    %78 = tpu.concatenate %76, %77 in 1 : vector<4x17xf32>, vector<4x239xf32> -> vector<4x256xf32>
    %c0_37 = arith.constant 0 : index
    %c0_38 = arith.constant 0 : index
    %c0_39 = arith.constant 0 : index
    %79 = vector.load %arg2[%c0_37, %c0_38, %c0_39] : memref<9x1x256xf32, #tpu.memory_space<vmem>>, vector<1x1x256xf32>
    %80 = vector.shape_cast %79 : vector<1x1x256xf32> to vector<1x256xf32>
    %81 = vector.broadcast %80 : vector<1x256xf32> to vector<4x256xf32>
    %82 = arith.mulf %78, %81 : vector<4x256xf32>
    %c0_40 = arith.constant 0 : index
    %c0_41 = arith.constant 0 : index
    %83 = vector.load %arg8[%c0_40, %c0_41] : memref<36x256xf32, #tpu.memory_space<vmem>>, vector<4x256xf32>
    tpu.vector_store %arg8[%c0_40, %c0_41], %82 {strides = array<i32>} : memref<36x256xf32, #tpu.memory_space<vmem>>, vector<4x256xf32>,
    %84 = vector.extract_strided_slice %75 {offsets = [0, 240], sizes = [4, 16], strides = [1, 1]} : vector<4x256xf32> to vector<4x16xf32>
    %85 = vector.extract_strided_slice %75 {offsets = [0, 0], sizes = [4, 240], strides = [1, 1]} : vector<4x256xf32> to vector<4x240xf32>
    %86 = tpu.concatenate %84, %85 in 1 : vector<4x16xf32>, vector<4x240xf32> -> vector<4x256xf32>
    %c1_42 = arith.constant 1 : index
    %c0_43 = arith.constant 0 : index
    %c0_44 = arith.constant 0 : index
    %87 = vector.load %arg2[%c1_42, %c0_43, %c0_44] : memref<9x1x256xf32, #tpu.memory_space<vmem>>, vector<1x1x256xf32>
    %88 = vector.shape_cast %87 : vector<1x1x256xf32> to vector<1x256xf32>
    %89 = vector.broadcast %88 : vector<1x256xf32> to vector<4x256xf32>
    %90 = arith.mulf %86, %89 : vector<4x256xf32>
    %c4_45 = arith.constant 4 : index
    %c0_46 = arith.constant 0 : index
    %91 = vector.load %arg8[%c4_45, %c0_46] : memref<36x256xf32, #tpu.memory_space<vmem>>, vector<4x256xf32>
    tpu.vector_store %arg8[%c4_45, %c0_46], %90 {strides = array<i32>} : memref<36x256xf32, #tpu.memory_space<vmem>>, vector<4x256xf32>,
    %92 = vector.extract_strided_slice %75 {offsets = [0, 241], sizes = [4, 15], strides = [1, 1]} : vector<4x256xf32> to vector<4x15xf32>
    %93 = vector.extract_strided_slice %75 {offsets = [0, 0], sizes = [4, 241], strides = [1, 1]} : vector<4x256xf32> to vector<4x241xf32>
    %94 = tpu.concatenate %92, %93 in 1 : vector<4x15xf32>, vector<4x241xf32> -> vector<4x256xf32>
    %c2_47 = arith.constant 2 : index
    %c0_48 = arith.constant 0 : index
    %c0_49 = arith.constant 0 : index
    %95 = vector.load %arg2[%c2_47, %c0_48, %c0_49] : memref<9x1x256xf32, #tpu.memory_space<vmem>>, vector<1x1x256xf32>
    %96 = vector.shape_cast %95 : vector<1x1x256xf32> to vector<1x256xf32>
    %97 = vector.broadcast %96 : vector<1x256xf32> to vector<4x256xf32>
    %98 = arith.mulf %94, %97 : vector<4x256xf32>
    %c8_50 = arith.constant 8 : index
    %c0_51 = arith.constant 0 : index
    %99 = vector.load %arg8[%c8_50, %c0_51] : memref<36x256xf32, #tpu.memory_space<vmem>>, vector<4x256xf32>
    tpu.vector_store %arg8[%c8_50, %c0_51], %98 {strides = array<i32>} : memref<36x256xf32, #tpu.memory_space<vmem>>, vector<4x256xf32>,
    %100 = vector.extract_strided_slice %75 {offsets = [0, 255], sizes = [4, 1], strides = [1, 1]} : vector<4x256xf32> to vector<4x1xf32>
    %101 = vector.extract_strided_slice %75 {offsets = [0, 0], sizes = [4, 255], strides = [1, 1]} : vector<4x256xf32> to vector<4x255xf32>
    %102 = tpu.concatenate %100, %101 in 1 : vector<4x1xf32>, vector<4x255xf32> -> vector<4x256xf32>
    %c3_52 = arith.constant 3 : index
    %c0_53 = arith.constant 0 : index
    %c0_54 = arith.constant 0 : index
    %103 = vector.load %arg2[%c3_52, %c0_53, %c0_54] : memref<9x1x256xf32, #tpu.memory_space<vmem>>, vector<1x1x256xf32>
    %104 = vector.shape_cast %103 : vector<1x1x256xf32> to vector<1x256xf32>
    %105 = vector.broadcast %104 : vector<1x256xf32> to vector<4x256xf32>
    %106 = arith.mulf %102, %105 : vector<4x256xf32>
    %c12_55 = arith.constant 12 : index
    %c0_56 = arith.constant 0 : index
    %107 = vector.load %arg8[%c12_55, %c0_56] : memref<36x256xf32, #tpu.memory_space<vmem>>, vector<4x256xf32>
    tpu.vector_store %arg8[%c12_55, %c0_56], %106 {strides = array<i32>} : memref<36x256xf32, #tpu.memory_space<vmem>>, vector<4x256xf32>,
    %c16_57 = arith.constant 16 : index
    %c0_58 = arith.constant 0 : index
    %108 = vector.load %arg8[%c16_57, %c0_58] : memref<36x256xf32, #tpu.memory_space<vmem>>, vector<4x256xf32>
    tpu.vector_store %arg8[%c16_57, %c0_58], %75 {strides = array<i32>} : memref<36x256xf32, #tpu.memory_space<vmem>>, vector<4x256xf32>,
    %109 = vector.extract_strided_slice %75 {offsets = [0, 1], sizes = [4, 255], strides = [1, 1]} : vector<4x256xf32> to vector<4x255xf32>
    %110 = vector.extract_strided_slice %75 {offsets = [0, 0], sizes = [4, 1], strides = [1, 1]} : vector<4x256xf32> to vector<4x1xf32>
    %111 = tpu.concatenate %109, %110 in 1 : vector<4x255xf32>, vector<4x1xf32> -> vector<4x256xf32>
    %c5_59 = arith.constant 5 : index
    %c0_60 = arith.constant 0 : index
    %c0_61 = arith.constant 0 : index
    %112 = vector.load %arg2[%c5_59, %c0_60, %c0_61] : memref<9x1x256xf32, #tpu.memory_space<vmem>>, vector<1x1x256xf32>
    %113 = vector.shape_cast %112 : vector<1x1x256xf32> to vector<1x256xf32>
    %114 = vector.broadcast %113 : vector<1x256xf32> to vector<4x256xf32>
    %115 = arith.mulf %111, %114 : vector<4x256xf32>
    %c20_62 = arith.constant 20 : index
    %c0_63 = arith.constant 0 : index
    %116 = vector.load %arg8[%c20_62, %c0_63] : memref<36x256xf32, #tpu.memory_space<vmem>>, vector<4x256xf32>
    tpu.vector_store %arg8[%c20_62, %c0_63], %115 {strides = array<i32>} : memref<36x256xf32, #tpu.memory_space<vmem>>, vector<4x256xf32>,
    %117 = vector.extract_strided_slice %75 {offsets = [0, 15], sizes = [4, 241], strides = [1, 1]} : vector<4x256xf32> to vector<4x241xf32>
    %118 = vector.extract_strided_slice %75 {offsets = [0, 0], sizes = [4, 15], strides = [1, 1]} : vector<4x256xf32> to vector<4x15xf32>
    %119 = tpu.concatenate %117, %118 in 1 : vector<4x241xf32>, vector<4x15xf32> -> vector<4x256xf32>
    %c6_64 = arith.constant 6 : index
    %c0_65 = arith.constant 0 : index
    %c0_66 = arith.constant 0 : index
    %120 = vector.load %arg2[%c6_64, %c0_65, %c0_66] : memref<9x1x256xf32, #tpu.memory_space<vmem>>, vector<1x1x256xf32>
    %121 = vector.shape_cast %120 : vector<1x1x256xf32> to vector<1x256xf32>
    %122 = vector.broadcast %121 : vector<1x256xf32> to vector<4x256xf32>
    %123 = arith.mulf %119, %122 : vector<4x256xf32>
    %c24_67 = arith.constant 24 : index
    %c0_68 = arith.constant 0 : index
    %124 = vector.load %arg8[%c24_67, %c0_68] : memref<36x256xf32, #tpu.memory_space<vmem>>, vector<4x256xf32>
    tpu.vector_store %arg8[%c24_67, %c0_68], %123 {strides = array<i32>} : memref<36x256xf32, #tpu.memory_space<vmem>>, vector<4x256xf32>,
    %125 = vector.extract_strided_slice %75 {offsets = [0, 16], sizes = [4, 240], strides = [1, 1]} : vector<4x256xf32> to vector<4x240xf32>
    %126 = vector.extract_strided_slice %75 {offsets = [0, 0], sizes = [4, 16], strides = [1, 1]} : vector<4x256xf32> to vector<4x16xf32>
    %127 = tpu.concatenate %125, %126 in 1 : vector<4x240xf32>, vector<4x16xf32> -> vector<4x256xf32>
    %c7_69 = arith.constant 7 : index
    %c0_70 = arith.constant 0 : index
    %c0_71 = arith.constant 0 : index
    %128 = vector.load %arg2[%c7_69, %c0_70, %c0_71] : memref<9x1x256xf32, #tpu.memory_space<vmem>>, vector<1x1x256xf32>
    %129 = vector.shape_cast %128 : vector<1x1x256xf32> to vector<1x256xf32>
    %130 = vector.broadcast %129 : vector<1x256xf32> to vector<4x256xf32>
    %131 = arith.mulf %127, %130 : vector<4x256xf32>
    %c28_72 = arith.constant 28 : index
    %c0_73 = arith.constant 0 : index
    %132 = vector.load %arg8[%c28_72, %c0_73] : memref<36x256xf32, #tpu.memory_space<vmem>>, vector<4x256xf32>
    tpu.vector_store %arg8[%c28_72, %c0_73], %131 {strides = array<i32>} : memref<36x256xf32, #tpu.memory_space<vmem>>, vector<4x256xf32>,
    %133 = vector.extract_strided_slice %75 {offsets = [0, 17], sizes = [4, 239], strides = [1, 1]} : vector<4x256xf32> to vector<4x239xf32>
    %134 = vector.extract_strided_slice %75 {offsets = [0, 0], sizes = [4, 17], strides = [1, 1]} : vector<4x256xf32> to vector<4x17xf32>
    %135 = tpu.concatenate %133, %134 in 1 : vector<4x239xf32>, vector<4x17xf32> -> vector<4x256xf32>
    %c8_74 = arith.constant 8 : index
    %c0_75 = arith.constant 0 : index
    %c0_76 = arith.constant 0 : index
    %136 = vector.load %arg2[%c8_74, %c0_75, %c0_76] : memref<9x1x256xf32, #tpu.memory_space<vmem>>, vector<1x1x256xf32>
    %137 = vector.shape_cast %136 : vector<1x1x256xf32> to vector<1x256xf32>
    %138 = vector.broadcast %137 : vector<1x256xf32> to vector<4x256xf32>
    %139 = arith.mulf %135, %138 : vector<4x256xf32>
    %c32_77 = arith.constant 32 : index
    %c0_78 = arith.constant 0 : index
    %140 = vector.load %arg8[%c32_77, %c0_78] : memref<36x256xf32, #tpu.memory_space<vmem>>, vector<4x256xf32>
    tpu.vector_store %arg8[%c32_77, %c0_78], %139 {strides = array<i32>} : memref<36x256xf32, #tpu.memory_space<vmem>>, vector<4x256xf32>,
    %c0_79 = arith.constant 0 : index
    %c0_80 = arith.constant 0 : index
    %141 = vector.load %arg8[%c0_79, %c0_80] : memref<36x256xf32, #tpu.memory_space<vmem>>, vector<36x256xf32>
    %142 = arith.truncf %141 : vector<36x256xf32> to vector<36x256xbf16>
    %c0_81 = arith.constant 0 : index
    %c0_82 = arith.constant 0 : index
    %143 = vector.load %arg5[%c0_81, %c0_82] : memref<4x36xbf16, #tpu.memory_space<vmem>>, vector<4x36xbf16>
    %cst_83 = arith.constant dense<0.000000e+00> : vector<4x256xf32>
    %144 = tpu.matmul %143, %142, %cst_83 {dimension_numbers = #tpu.dot_dimension_numbers<[1], [0], [0], [1], [0, 0, 1, 1], [], []>} : vector<4x36xbf16>, vector<36x256xbf16>, vector<4x256xf32> -> vector<4x256xf32>
    %c0_84 = arith.constant 0 : index
    %c0_85 = arith.constant 0 : index
    %145 = vector.load %arg6[%c0_84, %c0_85] : memref<4x1xf32, #tpu.memory_space<vmem>>, vector<4x1xf32>
    %146 = vector.broadcast %145 : vector<4x1xf32> to vector<4x256xf32>
    %147 = arith.addf %144, %146 : vector<4x256xf32>
    %148 = arith.addf %147, %1 : vector<4x256xf32>
    %cst_86 = arith.constant 0.000000e+00 : f32
    %149 = vector.broadcast %cst_86 : f32 to vector<4x256xf32>
    %150 = arith.maximumf %148, %149 : vector<4x256xf32>
    %c0_87 = arith.constant 0 : index
    %c0_88 = arith.constant 0 : index
    %c0_89 = arith.constant 0 : index
    %151 = vector.load %arg7[%c0_87, %c0_88, %c0_89] : memref<1x4x256xf32, #tpu.memory_space<vmem>>, vector<1x4x256xf32>
    %152 = vector.shape_cast %151 : vector<1x4x256xf32> to vector<4x256xf32>
    %153 = vector.shape_cast %150 : vector<4x256xf32> to vector<1x4x256xf32>
    tpu.vector_store %arg7[%c0_87, %c0_88, %c0_89], %153 {strides = array<i32>} : memref<1x4x256xf32, #tpu.memory_space<vmem>>, vector<1x4x256xf32>,
    return
  }
  func.func @transform_0(%arg0: i32) -> (i32, i32, i32) {
    %c0_i32 = arith.constant 0 : i32
    %c0_i32_0 = arith.constant 0 : i32
    %c0_i32_1 = arith.constant 0 : i32
    return %arg0, %c0_i32, %c0_i32_0 : i32, i32, i32
  }
  func.func @transform_1(%arg0: i32) -> (i32, i32, i32) {
    %c0_i32 = arith.constant 0 : i32
    %c0_i32_0 = arith.constant 0 : i32
    %c0_i32_1 = arith.constant 0 : i32
    %c0_i32_2 = arith.constant 0 : i32
    return %c0_i32, %c0_i32_0, %c0_i32_1 : i32, i32, i32
  }
  func.func @transform_2(%arg0: i32) -> (i32, i32) {
    %c0_i32 = arith.constant 0 : i32
    %c0_i32_0 = arith.constant 0 : i32
    %c0_i32_1 = arith.constant 0 : i32
    return %c0_i32, %c0_i32_0 : i32, i32
  }
  func.func @transform_3(%arg0: i32) -> (i32, i32) {
    %c0_i32 = arith.constant 0 : i32
    %c0_i32_0 = arith.constant 0 : i32
    %c0_i32_1 = arith.constant 0 : i32
    return %c0_i32, %c0_i32_0 : i32, i32
  }
  func.func @transform_4(%arg0: i32) -> (i32, i32) {
    %c0_i32 = arith.constant 0 : i32
    %c0_i32_0 = arith.constant 0 : i32
    %c0_i32_1 = arith.constant 0 : i32
    return %c0_i32, %c0_i32_0 : i32, i32
  }
  func.func @transform_5(%arg0: i32) -> (i32, i32) {
    %c0_i32 = arith.constant 0 : i32
    %c0_i32_0 = arith.constant 0 : i32
    %c0_i32_1 = arith.constant 0 : i32
    return %c0_i32, %c0_i32_0 : i32, i32
  }
  func.func @transform_6(%arg0: i32) -> (i32, i32, i32) {
    %c0_i32 = arith.constant 0 : i32
    %c0_i32_0 = arith.constant 0 : i32
    %c0_i32_1 = arith.constant 0 : i32
    return %arg0, %c0_i32, %c0_i32_0 : i32, i32, i32
  }
}

</mosaic_0001>

<llo_original>
// kernel: basic_block_forward.1
$region0: #{basic_block_forward.1}
  #allocation0 [shape = 'u32[]', space=smem, size = 0x4, offset = 0x4, fixed_abs, tag = 'smem constant byte address 0x4 - core index']
  #allocation1 [shape = 'u32[144,128]{1,0:T(1,128)}', space=vmem, size = 0x12000, scoped, tag = 'internal scratch']
  #allocation2 [shape = 'f32[36,256]{1,0:T(8,128)}', space=vmem, size = 0xa000, scoped, tag = 'scratch operand']
  %s0 = inlined_call_operand.vmem [shape: f32[2,4,256], index: 0, kind: input, shape index: {}]
  %s1 = inlined_call_operand.vmem [shape: f32[9,1,256], index: 1, kind: input, shape index: {}]
  %s2 = inlined_call_operand.vmem [shape: bf16[4,36], index: 2, kind: input, shape index: {}]
  %s3 = inlined_call_operand.vmem [shape: f32[4,1], index: 3, kind: input, shape index: {}]
  %s4 = inlined_call_operand.vmem [shape: bf16[4,36], index: 4, kind: input, shape index: {}]
  %s5 = inlined_call_operand.vmem [shape: f32[4,1], index: 5, kind: input, shape index: {}]
  %s6 = inlined_call_operand.vmem [shape: f32[2,4,256], index: 6, kind: output, shape index: {}]
  %s7 = sld [smem:[#allocation0]]
  $region57: #{basic_block_forward.1} parent=0
    _
  %s9 = ssub.s32 1, %s7
  %s10 = scalar_select 0, %s9, %s7
  loop: start=0, step=1, limit=4
  $region2: #{basic_block_forward.1} parent=0 // loop_pre_header
    _
  $region3: #{basic_block_forward.1} parent=0 // loop_header
    %s12 = sphi 0, %s16
    %p13 = scmp.ge.s32.totalorder %s12, 4
    %s22 = sphi 0, %s24
    %s25 = sphi 0, %s22
    %s26 = sphi 0, %s25
    %s42 = sphi 0, %s26
    %s46 = sphi 0, %s46
    %s48 = sphi 0, %s46
    %s49 = sphi 0, %s48
    %s63 = sphi 0, %s49
    %s67 = sphi 0, %s67
    %s69 = sphi 0, %s67
    %s70 = sphi 0, %s69
    %s84 = sphi 0, %s70
    %s88 = sphi 0, %s88
    %s90 = sphi 0, %s88
    %s91 = sphi 0, %s90
    %s105 = sphi 0, %s91
    %s109 = sphi 0, %s109
    %s111 = sphi 0, %s109
    %s112 = sphi 0, %s111
    %s126 = sphi 0, %s112
    %s130 = sphi 0, %s130
    %s132 = sphi 0, %s130
    %s133 = sphi 0, %s132
    %s147 = sphi 0, %s133
    %s153 = sphi 0, %s155
    %s156 = sphi 0, %s153
    %s157 = sphi 0, %s156
    %s173 = sphi 0, %s157
  $region4: #{basic_block_forward.1} parent=0 // loop_header_branch
    %15 = sbr.rel (%p13) target = $region8
  $region5: #{basic_block_forward.1} parent=0 // loop_body
    %s17 = ssub.s32 %s12, 1
    %s18 = ssub.s32 %s12, 2
    %s19 = sadd.s32 %s12, 1
    %s20 = ssub.s32 %s12, %s19
    %p21 = scmp.eq.s32.totalorder %s20, 0
    %s23 = sadd.s32 %s22, 1
    %s24 = scalar_select %p21, %s22, %s23
    %p27 = pneg %p21
    %p28 = scmp.eq.s32.totalorder %s12, 1
    %p29 = por %p27, %p28
    %p30 = scmp.ne.s32.totalorder %s22, %s25
    %p31 = scmp.eq.s32.totalorder %s12, 0
    %p32 = por %p30, %p31
    %p33 = scmp.ne.s32.totalorder %s22, %s25
    %p34 = scmp.eq.s32.totalorder %s17, 1
    %p35 = por %p33, %p34
    %p36 = scmp.ne.s32.totalorder %s25, %s26
    %p37 = scmp.eq.s32.totalorder %s17, 0
    %p38 = por %p36, %p37
    %p39 = scmp.ne.s32.totalorder %s25, %s26
    %p40 = scmp.eq.s32.totalorder %s18, 1
    %p41 = por %p39, %p40
    %p43 = scmp.ne.s32.totalorder %s26, %s42
    %p44 = scmp.eq.s32.totalorder %s18, 0
    %p45 = por %p43, %p44
    %s47 = sadd.s32 %s46, 1
    %p50 = scmp.eq.s32.totalorder %s12, 1
    %p51 = scmp.ne.s32.totalorder %s46, %s48
    %p52 = scmp.eq.s32.totalorder %s12, 0
    %p53 = por %p51, %p52
    %p54 = scmp.ne.s32.totalorder %s46, %s48
    %p55 = scmp.eq.s32.totalorder %s17, 1
    %p56 = por %p54, %p55
    %p57 = scmp.ne.s32.totalorder %s48, %s49
    %p58 = scmp.eq.s32.totalorder %s17, 0
    %p59 = por %p57, %p58
    %p60 = scmp.ne.s32.totalorder %s48, %s49
    %p61 = scmp.eq.s32.totalorder %s18, 1
    %p62 = por %p60, %p61
    %p64 = scmp.ne.s32.totalorder %s49, %s63
    %p65 = scmp.eq.s32.totalorder %s18, 0
    %p66 = por %p64, %p65
    %s68 = sadd.s32 %s67, 1
    %p71 = scmp.eq.s32.totalorder %s12, 1
    %p72 = scmp.ne.s32.totalorder %s67, %s69
    %p73 = scmp.eq.s32.totalorder %s12, 0
    %p74 = por %p72, %p73
    %p75 = scmp.ne.s32.totalorder %s67, %s69
    %p76 = scmp.eq.s32.totalorder %s17, 1
    %p77 = por %p75, %p76
    %p78 = scmp.ne.s32.totalorder %s69, %s70
    %p79 = scmp.eq.s32.totalorder %s17, 0
    %p80 = por %p78, %p79
    %p81 = scmp.ne.s32.totalorder %s69, %s70
    %p82 = scmp.eq.s32.totalorder %s18, 1
    %p83 = por %p81, %p82
    %p85 = scmp.ne.s32.totalorder %s70, %s84
    %p86 = scmp.eq.s32.totalorder %s18, 0
    %p87 = por %p85, %p86
    %s89 = sadd.s32 %s88, 1
    %p92 = scmp.eq.s32.totalorder %s12, 1
    %p93 = scmp.ne.s32.totalorder %s88, %s90
    %p94 = scmp.eq.s32.totalorder %s12, 0
    %p95 = por %p93, %p94
    %p96 = scmp.ne.s32.totalorder %s88, %s90
    %p97 = scmp.eq.s32.totalorder %s17, 1
    %p98 = por %p96, %p97
    %p99 = scmp.ne.s32.totalorder %s90, %s91
    %p100 = scmp.eq.s32.totalorder %s17, 0
    %p101 = por %p99, %p100
    %p102 = scmp.ne.s32.totalorder %s90, %s91
    %p103 = scmp.eq.s32.totalorder %s18, 1
    %p104 = por %p102, %p103
    %p106 = scmp.ne.s32.totalorder %s91, %s105
    %p107 = scmp.eq.s32.totalorder %s18, 0
    %p108 = por %p106, %p107
    %s110 = sadd.s32 %s109, 1
    %p113 = scmp.eq.s32.totalorder %s12, 1
    %p114 = scmp.ne.s32.totalorder %s109, %s111
    %p115 = scmp.eq.s32.totalorder %s12, 0
    %p116 = por %p114, %p115
    %p117 = scmp.ne.s32.totalorder %s109, %s111
    %p118 = scmp.eq.s32.totalorder %s17, 1
    %p119 = por %p117, %p118
    %p120 = scmp.ne.s32.totalorder %s111, %s112
    %p121 = scmp.eq.s32.totalorder %s17, 0
    %p122 = por %p120, %p121
    %p123 = scmp.ne.s32.totalorder %s111, %s112
    %p124 = scmp.eq.s32.totalorder %s18, 1
    %p125 = por %p123, %p124
    %p127 = scmp.ne.s32.totalorder %s112, %s126
    %p128 = scmp.eq.s32.totalorder %s18, 0
    %p129 = por %p127, %p128
    %s131 = sadd.s32 %s130, 1
    %p134 = scmp.eq.s32.totalorder %s12, 1
    %p135 = scmp.ne.s32.totalorder %s130, %s132
    %p136 = scmp.eq.s32.totalorder %s12, 0
    %p137 = por %p135, %p136
    %p138 = scmp.ne.s32.totalorder %s130, %s132
    %p139 = scmp.eq.s32.totalorder %s17, 1
    %p140 = por %p138, %p139
    %p141 = scmp.ne.s32.totalorder %s132, %s133
    %p142 = scmp.eq.s32.totalorder %s17, 0
    %p143 = por %p141, %p142
    %p144 = scmp.ne.s32.totalorder %s132, %s133
    %p145 = scmp.eq.s32.totalorder %s18, 1
    %p146 = por %p144, %p145
    %p148 = scmp.ne.s32.totalorder %s133, %s147
    %p149 = scmp.eq.s32.totalorder %s18, 0
    %p150 = por %p148, %p149
    %s151 = ssub.s32 %s12, %s19
    %p152 = scmp.eq.s32.totalorder %s151, 0
    %s154 = sadd.s32 %s153, 1
    %s155 = scalar_select %p152, %s153, %s154
    %p158 = pneg %p152
    %p159 = scmp.eq.s32.totalorder %s12, 1
    %p160 = por %p158, %p159
    %p161 = scmp.ne.s32.totalorder %s153, %s156
    %p162 = scmp.eq.s32.totalorder %s12, 0
    %p163 = por %p161, %p162
    %p164 = scmp.ne.s32.totalorder %s153, %s156
    %p165 = scmp.eq.s32.totalorder %s17, 1
    %p166 = por %p164, %p165
    %p167 = scmp.ne.s32.totalorder %s156, %s157
    %p168 = scmp.eq.s32.totalorder %s17, 0
    %p169 = por %p167, %p168
    %p170 = scmp.ne.s32.totalorder %s156, %s157
    %p171 = scmp.eq.s32.totalorder %s18, 1
    %p172 = por %p170, %p171
    %p174 = scmp.ne.s32.totalorder %s157, %s173
    %p175 = scmp.eq.s32.totalorder %s18, 0
    %p176 = por %p174, %p175
    %p177 = scmp.le.s32.totalorder 1, %s12
    %p178 = scmp.lt.s32.totalorder %s12, 3
    %p179 = pnand %p177, %p178
    %p180 = pneg %p179
    // Predicated region
    $region9: #{basic_block_forward.1} parent=5 // pred_check
      _
    $region10: #{basic_block_forward.1} parent=5 // pred_check_branch
      %182 = sbr.rel (%p179) target = $region12
    $region11: #{basic_block_forward.1} parent=5 // pred_region
      %s183 = ssub.s32 %s12, 1
      // Predicated region
      $region13: #{basic_block_forward.1} parent=11 // pred_check
        %p184 = pneg %p59
      $region14: #{basic_block_forward.1} parent=11 // pred_check_branch
        %186 = sbr.rel (%p184) target = $region16
      $region15: #{basic_block_forward.1} parent=11 // pred_region
        _
      $region16: #{basic_block_forward.1} parent=11 // pred_fallthru
        _
      // Predicated region
      $region17: #{basic_block_forward.1} parent=11 // pred_check
        %p187 = pneg %p80
      $region18: #{basic_block_forward.1} parent=11 // pred_check_branch
        %189 = sbr.rel (%p187) target = $region20
      $region19: #{basic_block_forward.1} parent=11 // pred_region
        _
      $region20: #{basic_block_forward.1} parent=11 // pred_fallthru
        _
      // Predicated region
      $region21: #{basic_block_forward.1} parent=11 // pred_check
        %p190 = pneg %p101
      $region22: #{basic_block_forward.1} parent=11 // pred_check_branch
        %192 = sbr.rel (%p190) target = $region24
      $region23: #{basic_block_forward.1} parent=11 // pred_region
        _
      $region24: #{basic_block_forward.1} parent=11 // pred_fallthru
        _
      // Predicated region
      $region25: #{basic_block_forward.1} parent=11 // pred_check
        %p193 = pneg %p122
      $region26: #{basic_block_forward.1} parent=11 // pred_check_branch
        %195 = sbr.rel (%p193) target = $region28
      $region27: #{basic_block_forward.1} parent=11 // pred_region
        _
      $region28: #{basic_block_forward.1} parent=11 // pred_fallthru
        _
      // Predicated region
      $region29: #{basic_block_forward.1} parent=11 // pred_check
        %p196 = pneg %p143
      $region30: #{basic_block_forward.1} parent=11 // pred_check_branch
        %198 = sbr.rel (%p196) target = $region32
      $region31: #{basic_block_forward.1} parent=11 // pred_region
        _
      $region32: #{basic_block_forward.1} parent=11 // pred_fallthru
        _
    $region12: #{basic_block_forward.1} parent=5 // pred_fallthru
      _
    %p199 = scmp.lt.s32.totalorder %s12, 2
    // Predicated region
    $region33: #{basic_block_forward.1} parent=5 // pred_check
      %p200 = pneg %p199
    $region34: #{basic_block_forward.1} parent=5 // pred_check_branch
      %202 = sbr.rel (%p200) target = $region36
    $region35: #{basic_block_forward.1} parent=5 // pred_region
      // Predicated region
      $region37: #{basic_block_forward.1} parent=35 // pred_check
        %p203 = pneg %p32
      $region38: #{basic_block_forward.1} parent=35 // pred_check_branch
        %205 = sbr.rel (%p203) target = $region40
      $region39: #{basic_block_forward.1} parent=35 // pred_region
        %p206 = scmp.lt.s32.totalorder %s12, 1
        %s207 = scalar_select %p206, %s12, 1
        %s208 = smul.addr %s207, 2
        %s209 = smul.addr %s208, 4
        %s210 = scalar_lea.vmem %s0, %s209
      $region40: #{basic_block_forward.1} parent=35 // pred_fallthru
        _
    $region36: #{basic_block_forward.1} parent=5 // pred_fallthru
      _
    %p211 = scmp.le.s32.totalorder 1, %s12
    %p212 = scmp.lt.s32.totalorder %s12, 3
    %p213 = pnand %p211, %p212
    %p214 = pneg %p213
    // Predicated region
    $region41: #{basic_block_forward.1} parent=5 // pred_check
      _
    $region42: #{basic_block_forward.1} parent=5 // pred_check_branch
      %216 = sbr.rel (%p213) target = $region44
    $region43: #{basic_block_forward.1} parent=5 // pred_region
      %s217 = ssub.s32 %s12, 1
      %p218 = scmp.lt.s32.totalorder %s17, 1
      %s219 = scalar_select %p218, %s17, 1
      %s220 = smul.addr %s219, 2
      %s221 = smul.addr %s220, 4
      %s222 = scalar_lea.vmem %s0, %s221
      %p223 = pneg %p38
      %p224 = pneg %p35
      %p225 = pneg %p59
      %p226 = pneg %p56
      %p227 = pneg %p80
      %p228 = pneg %p77
      %p229 = pneg %p101
      %p230 = pneg %p98
      %p231 = pneg %p122
      %p232 = pneg %p119
      %p233 = pneg %p143
      %p234 = pneg %p140
      %p235 = pneg %p169
      %p236 = pneg %p166
      %p237 = scmp.lt.s32.totalorder %s17, 1
      %s238 = scalar_select %p237, %s17, 1
      %s239 = smul.addr %s238, 2
      %s240 = smul.addr %s239, 4
      %s241 = scalar_lea.vmem %s6, %s240
      %p242 = scmp.lt.s32.totalorder %s17, 1
      %s243 = scalar_select %p242, %s17, 1
      %s244 = smul.addr %s243, 2
      %s245 = smul.addr %s244, 4
      %s246 = scalar_lea.vmem %s0, %s245
      %p247 = scmp.lt.s32.totalorder %s17, 1
      %s248 = scalar_select %p247, %s17, 1
      %s249 = smul.addr %s248, 2
      %s250 = smul.addr %s249, 4
      %s251 = scalar_lea.vmem %s6, %s250
      %v253 = vld [vmem:[%s246] sm:$0xff]
      %v255 = vcombine.high %v253, %v253
      %256 = vrot.lane.b32.xlu0 %v255, 17
      %v257 = vpop.permute.xlu0 %256
      %259 = vrot.lane.b32.xlu0 %v253, 17
      %v260 = vpop.permute.xlu0 %259
      %vm261 = vcmask 138240
      %v262 = vsel %vm261, %v260, %v257
      %v265 = vsel %vm261, %v257, %v260
      %v266 = vld [vmem:[%s1] sm:$0x3]
      %v268 = vlaneseq
      %v269 = vshrl.u32 %v268, 7
      %v270 = vsub.s32 0, %v269
      %v271 = vrot.slane %v266, %v270
      %v272 = vlaneseq
      %v273 = vshrl.u32 %v272, 7
      %v274 = vsub.s32 1, %v273
      %v275 = vrot.slane %v266, %v274
      %v278 = vmul.f32 %v265, %v271
      %v279 = vmul.f32 %v262, %v275
      %280 = vst [vmem:[#allocation2] sm:$0xf] %v278
      %281 = vst [vmem:[#allocation2 + $0x8] sm:$0xf] %v279
      %282 = vrot.lane.b32.xlu0 %v255, 16
      %v283 = vpop.permute.xlu0 %282
      %285 = vrot.lane.b32.xlu0 %v253, 16
      %v286 = vpop.permute.xlu0 %285
      %vm287 = vcmask 130048
      %v288 = vsel %vm287, %v286, %v283
      %v291 = vsel %vm287, %v283, %v286
      %s292 = scalar_lea.vmem %s1, 2
      %v293 = vld [vmem:[%s292] sm:$0x3]
      %v295 = vlaneseq
      %v296 = vshrl.u32 %v295, 7
      %v297 = vsub.s32 0, %v296
      %v298 = vrot.slane %v293, %v297
      %v299 = vlaneseq
      %v300 = vshrl.u32 %v299, 7
      %v301 = vsub.s32 1, %v300
      %v302 = vrot.slane %v293, %v301
      %v305 = vmul.f32 %v291, %v298
      %v306 = vmul.f32 %v288, %v302
      %v309 = vrot.slane %v305, 4
      %v310 = vrot.slane %v306, 4
      %313 = vst [vmem:[#allocation2] sm:$0xf0] %v309
      %314 = vst [vmem:[#allocation2 + $0x8] sm:$0xf0] %v310
      %315 = vrot.lane.b32.xlu0 %v255, 15
      %v316 = vpop.permute.xlu0 %315
      %318 = vrot.lane.b32.xlu0 %v253, 15
      %v319 = vpop.permute.xlu0 %318
      %vm320 = vcmask 121856
      %v321 = vsel %vm320, %v319, %v316
      %v324 = vsel %vm320, %v316, %v319
      %s325 = scalar_lea.vmem %s1, 4
      %v326 = vld [vmem:[%s325] sm:$0x3]
      %v328 = vlaneseq
      %v329 = vshrl.u32 %v328, 7
      %v330 = vsub.s32 0, %v329
      %v331 = vrot.slane %v326, %v330
      %v332 = vlaneseq
      %v333 = vshrl.u32 %v332, 7
      %v334 = vsub.s32 1, %v333
      %v335 = vrot.slane %v326, %v334
      %v338 = vmul.f32 %v324, %v331
      %v339 = vmul.f32 %v321, %v335
      %340 = vst [vmem:[#allocation2 + $0x10] sm:$0xf] %v338
      %341 = vst [vmem:[#allocation2 + $0x18] sm:$0xf] %v339
      %342 = vrot.lane.b32.xlu0 %v255, 1
      %v343 = vpop.permute.xlu0 %342
      %345 = vrot.lane.b32.xlu0 %v253, 1
      %v346 = vpop.permute.xlu0 %345
      %vm347 = vcmask 7168
      %v348 = vsel %vm347, %v346, %v343
      %v351 = vsel %vm347, %v343, %v346
      %s352 = scalar_lea.vmem %s1, 6
      %v353 = vld [vmem:[%s352] sm:$0x3]
      %v355 = vlaneseq
      %v356 = vshrl.u32 %v355, 7
      %v357 = vsub.s32 0, %v356
      %v358 = vrot.slane %v353, %v357
      %v359 = vlaneseq
      %v360 = vshrl.u32 %v359, 7
      %v361 = vsub.s32 1, %v360
      %v362 = vrot.slane %v353, %v361
      %v365 = vmul.f32 %v351, %v358
      %v366 = vmul.f32 %v348, %v362
      %v369 = vrot.slane %v365, 4
      %v370 = vrot.slane %v366, 4
      %373 = vst [vmem:[#allocation2 + $0x10] sm:$0xf0] %v369
      %374 = vst [vmem:[#allocation2 + $0x18] sm:$0xf0] %v370
      %376 = vst [vmem:[#allocation2 + $0x20] sm:$0xf] %v253
      %377 = vst [vmem:[#allocation2 + $0x28] sm:$0xf] %v255
      %378 = vrot.lane.b32.xlu0 %v253, 127
      %v379 = vpop.permute.xlu0 %378
      %380 = vrot.lane.b32.xlu0 %v255, 127
      %v381 = vpop.permute.xlu0 %380
      %vm382 = vcmask 1039360
      %v383 = vsel %vm382, %v379, %v381
      %v387 = vsel %vm382, %v381, %v379
      %s388 = scalar_lea.vmem %s1, 10
      %v389 = vld [vmem:[%s388] sm:$0x3]
      %v391 = vlaneseq
      %v392 = vshrl.u32 %v391, 7
      %v393 = vsub.s32 0, %v392
      %v394 = vrot.slane %v389, %v393
      %v395 = vlaneseq
      %v396 = vshrl.u32 %v395, 7
      %v397 = vsub.s32 1, %v396
      %v398 = vrot.slane %v389, %v397
      %v401 = vmul.f32 %v383, %v394
      %v402 = vmul.f32 %v387, %v398
      %v405 = vrot.slane %v401, 4
      %v406 = vrot.slane %v402, 4
      %409 = vst [vmem:[#allocation2 + $0x20] sm:$0xf0] %v405
      %410 = vst [vmem:[#allocation2 + $0x28] sm:$0xf0] %v406
      %411 = vrot.lane.b32.xlu0 %v253, 113
      %v412 = vpop.permute.xlu0 %411
      %413 = vrot.lane.b32.xlu0 %v255, 113
      %v414 = vpop.permute.xlu0 %413
      %vm415 = vcmask 924672
      %v416 = vsel %vm415, %v412, %v414
      %v420 = vsel %vm415, %v414, %v412
      %s421 = scalar_lea.vmem %s1, 12
      %v422 = vld [vmem:[%s421] sm:$0x3]
      %v424 = vlaneseq
      %v425 = vshrl.u32 %v424, 7
      %v426 = vsub.s32 0, %v425
      %v427 = vrot.slane %v422, %v426
      %v428 = vlaneseq
      %v429 = vshrl.u32 %v428, 7
      %v430 = vsub.s32 1, %v429
      %v431 = vrot.slane %v422, %v430
      %v434 = vmul.f32 %v416, %v427
      %v435 = vmul.f32 %v420, %v431
      %436 = vst [vmem:[#allocation2 + $0x30] sm:$0xf] %v434
      %437 = vst [vmem:[#allocation2 + $0x38] sm:$0xf] %v435
      %438 = vrot.lane.b32.xlu0 %v253, 112
      %v439 = vpop.permute.xlu0 %438
      %440 = vrot.lane.b32.xlu0 %v255, 112
      %v441 = vpop.permute.xlu0 %440
      %vm442 = vcmask 916480
      %v443 = vsel %vm442, %v439, %v441
      %v447 = vsel %vm442, %v441, %v439
      %s448 = scalar_lea.vmem %s1, 14
      %v449 = vld [vmem:[%s448] sm:$0x3]
      %v451 = vlaneseq
      %v452 = vshrl.u32 %v451, 7
      %v453 = vsub.s32 0, %v452
      %v454 = vrot.slane %v449, %v453
      %v455 = vlaneseq
      %v456 = vshrl.u32 %v455, 7
      %v457 = vsub.s32 1, %v456
      %v458 = vrot.slane %v449, %v457
      %v461 = vmul.f32 %v443, %v454
      %v462 = vmul.f32 %v447, %v458
      %v465 = vrot.slane %v461, 4
      %v466 = vrot.slane %v462, 4
      %469 = vst [vmem:[#allocation2 + $0x30] sm:$0xf0] %v465
      %470 = vst [vmem:[#allocation2 + $0x38] sm:$0xf0] %v466
      %471 = vrot.lane.b32.xlu0 %v253, 111
      %v472 = vpop.permute.xlu0 %471
      %473 = vrot.lane.b32.xlu0 %v255, 111
      %v474 = vpop.permute.xlu0 %473
      %vm475 = vcmask 908288
      %v476 = vsel %vm475, %v472, %v474
      %v480 = vsel %vm475, %v474, %v472
      %s481 = scalar_lea.vmem %s1, 16
      %v482 = vld [vmem:[%s481] sm:$0x3]
      %v484 = vlaneseq
      %v485 = vshrl.u32 %v484, 7
      %v486 = vsub.s32 0, %v485
      %v487 = vrot.slane %v482, %v486
      %v488 = vlaneseq
      %v489 = vshrl.u32 %v488, 7
      %v490 = vsub.s32 1, %v489
      %v491 = vrot.slane %v482, %v490
      %v494 = vmul.f32 %v476, %v487
      %v495 = vmul.f32 %v480, %v491
      %496 = vst [vmem:[#allocation2 + $0x40] sm:$0xf] %v494
      %497 = vst [vmem:[#allocation2 + $0x48] sm:$0xf] %v495
      %v498 = vld [vmem:[#allocation2] sm:$0xff]
      %v499 = vld [vmem:[#allocation2 + $0x8] sm:$0xff]
      %v500 = vld [vmem:[#allocation2 + $0x10] sm:$0xff]
      %v501 = vld [vmem:[#allocation2 + $0x18] sm:$0xff]
      %v502 = vld [vmem:[#allocation2 + $0x20] sm:$0xff]
      %v503 = vld [vmem:[#allocation2 + $0x28] sm:$0xff]
      %v504 = vld [vmem:[#allocation2 + $0x30] sm:$0xff]
      %v505 = vld [vmem:[#allocation2 + $0x38] sm:$0xff]
      %v506 = vld [vmem:[#allocation2 + $0x40] sm:$0xf]
      %v507 = vld [vmem:[#allocation2 + $0x48] sm:$0xf]
      %v508 = vpack.c.bf16 %v500, %v498
      %v509 = vpack.c.bf16 %v501, %v499
      %v510 = vpack.c.bf16 %v504, %v502
      %v511 = vpack.c.bf16 %v505, %v503
      %v512 = vpack.c.bf16 %v506, %v506
      %v513 = vpack.c.bf16 %v507, %v507
      %v514 = vld [vmem:[%s2] sm:$0x3]
      %v515 = vld [vmem:[%s3] sm:$0xf]
      %517 = vset.pattern.permute.xlu0 0
      %518 = vperm.xlu0 %517, %v515
      %v519 = vpop.permute.xlu0 %518
      %vm521 = vcmask 293888
      %v523 = vsel %vm521, %v514, 0
      %vm525 = vcmask 1041408
      %v527 = vsel %vm525, %v512, 0
      %v530 = vsel %vm525, %v513, 0
      %532 = vmatprep.subr.bf16.mxu0 0
      %533 = vmatpush1.bf16.msra.mxu0 0
      %534 = vmatprep.subr.bf16.mxu0 0
      %535 = vmatpush1.bf16.msra.mxu0 0
      %536 = vmatprep.subr.bf16.mxu0 0
      %537 = vmatpush1.bf16.msra.mxu0 0
      %538 = vmatprep.subr.bf16.mxu0 0
      %539 = vmatpush1.bf16.msra.mxu0 0
      %540 = vmatprep.subr.bf16.mxu0 0
      %541 = vmatpush1.bf16.msra.mxu0 0
      %542 = vmatprep.subr.bf16.mxu0 %v530
      %543 = vmatpush1.bf16.msra.mxu0 %v527
      %544 = vmatprep.subr.bf16.mxu0 %v511
      %545 = vmatpush1.bf16.msra.mxu0 %v510
      %546 = vmatprep.subr.bf16.mxu0 %v509
      %547 = vmatpush1.bf16.msra.mxu0 %v508
      %548 = vmatprep.subr.bf16.mxu0 0
      %549 = vmatpush2.bf16.msra.mxu0 0
      %550 = vmatprep.subr.bf16.mxu0 0
      %551 = vmatpush2.bf16.msra.mxu0 0
      %552 = vmatprep.subr.bf16.mxu0 0
      %553 = vmatpush2.bf16.msra.mxu0 0
      %554 = vmatprep.subr.bf16.mxu0 0
      %555 = vmatpush2.bf16.msra.mxu0 0
      %556 = vmatprep.subr.bf16.mxu0 0
      %557 = vmatpush2.bf16.msra.mxu0 0
      %558 = vmatprep.subr.bf16.mxu0 0
      %559 = vmatpush2.bf16.msra.mxu0 0
      %560 = vmatprep.subr.bf16.mxu0 0
      %561 = vmatpush2.bf16.msra.mxu0 0
      %562 = vmatprep.subr.bf16.mxu0 0
      %563 = vmatpush2.bf16.msra.mxu0 0
      %564 = vmatprep.mubr.bf16.mxu0 0
      %565 = vmatmul.mubr.bf16.gmra.mxu0 %v523
      %v566 = vpop.f32.mrf.mxu0
      %v567 = vadd.f32 %v519, %v566
      %v568 = vpop.f32.mrf.mxu0
      %v569 = vadd.f32 %v519, %v568
      %v570 = vpop.f32.mrf.mxu0
      %v571 = vpop.f32.mrf.mxu0
      %572 = vdwg.mxu0
      %v573 = vmax.f32 %v567, 0.0
      %v574 = vmax.f32 %v569, 0.0
      %576 = vrot.lane.b32.xlu0 %v574, 17
      %v577 = vpop.permute.xlu0 %576
      %580 = vrot.lane.b32.xlu0 %v573, 17
      %v581 = vpop.permute.xlu0 %580
      %v582 = vsel %vm261, %v581, %v577
      %v585 = vsel %vm261, %v577, %v581
      %v586 = vld [vmem:[%s1] sm:$0x3]
      %v588 = vlaneseq
      %v589 = vshrl.u32 %v588, 7
      %v590 = vsub.s32 0, %v589
      %v591 = vrot.slane %v586, %v590
      %v592 = vlaneseq
      %v593 = vshrl.u32 %v592, 7
      %v594 = vsub.s32 1, %v593
      %v595 = vrot.slane %v586, %v594
      %v598 = vmul.f32 %v585, %v591
      %v599 = vmul.f32 %v582, %v595
      %600 = vst [vmem:[#allocation2] sm:$0xf] %v598
      %601 = vst [vmem:[#allocation2 + $0x8] sm:$0xf] %v599
      %602 = vrot.lane.b32.xlu0 %v574, 16
      %v603 = vpop.permute.xlu0 %602
      %605 = vrot.lane.b32.xlu0 %v573, 16
      %v606 = vpop.permute.xlu0 %605
      %v607 = vsel %vm287, %v606, %v603
      %v610 = vsel %vm287, %v603, %v606
      %v611 = vld [vmem:[%s292] sm:$0x3]
      %v613 = vlaneseq
      %v614 = vshrl.u32 %v613, 7
      %v615 = vsub.s32 0, %v614
      %v616 = vrot.slane %v611, %v615
      %v617 = vlaneseq
      %v618 = vshrl.u32 %v617, 7
      %v619 = vsub.s32 1, %v618
      %v620 = vrot.slane %v611, %v619
      %v623 = vmul.f32 %v610, %v616
      %v624 = vmul.f32 %v607, %v620
      %v627 = vrot.slane %v623, 4
      %v628 = vrot.slane %v624, 4
      %631 = vst [vmem:[#allocation2] sm:$0xf0] %v627
      %632 = vst [vmem:[#allocation2 + $0x8] sm:$0xf0] %v628
      %633 = vrot.lane.b32.xlu0 %v574, 15
      %v634 = vpop.permute.xlu0 %633
      %636 = vrot.lane.b32.xlu0 %v573, 15
      %v637 = vpop.permute.xlu0 %636
      %v638 = vsel %vm320, %v637, %v634
      %v641 = vsel %vm320, %v634, %v637
      %v642 = vld [vmem:[%s325] sm:$0x3]
      %v644 = vlaneseq
      %v645 = vshrl.u32 %v644, 7
      %v646 = vsub.s32 0, %v645
      %v647 = vrot.slane %v642, %v646
      %v648 = vlaneseq
      %v649 = vshrl.u32 %v648, 7
      %v650 = vsub.s32 1, %v649
      %v651 = vrot.slane %v642, %v650
      %v654 = vmul.f32 %v641, %v647
      %v655 = vmul.f32 %v638, %v651
      %656 = vst [vmem:[#allocation2 + $0x10] sm:$0xf] %v654
      %657 = vst [vmem:[#allocation2 + $0x18] sm:$0xf] %v655
      %658 = vrot.lane.b32.xlu0 %v574, 1
      %v659 = vpop.permute.xlu0 %658
      %661 = vrot.lane.b32.xlu0 %v573, 1
      %v662 = vpop.permute.xlu0 %661
      %v663 = vsel %vm347, %v662, %v659
      %v666 = vsel %vm347, %v659, %v662
      %v667 = vld [vmem:[%s352] sm:$0x3]
      %v669 = vlaneseq
      %v670 = vshrl.u32 %v669, 7
      %v671 = vsub.s32 0, %v670
      %v672 = vrot.slane %v667, %v671
      %v673 = vlaneseq
      %v674 = vshrl.u32 %v673, 7
      %v675 = vsub.s32 1, %v674
      %v676 = vrot.slane %v667, %v675
      %v679 = vmul.f32 %v666, %v672
      %v680 = vmul.f32 %v663, %v676
      %v683 = vrot.slane %v679, 4
      %v684 = vrot.slane %v680, 4
      %687 = vst [vmem:[#allocation2 + $0x10] sm:$0xf0] %v683
      %688 = vst [vmem:[#allocation2 + $0x18] sm:$0xf0] %v684
      %689 = vst [vmem:[#allocation2 + $0x20] sm:$0xf] %v573
      %690 = vst [vmem:[#allocation2 + $0x28] sm:$0xf] %v574
      %691 = vrot.lane.b32.xlu0 %v573, 127
      %v692 = vpop.permute.xlu0 %691
      %693 = vrot.lane.b32.xlu0 %v574, 127
      %v694 = vpop.permute.xlu0 %693
      %v695 = vsel %vm382, %v692, %v694
      %v699 = vsel %vm382, %v694, %v692
      %v700 = vld [vmem:[%s388] sm:$0x3]
      %v702 = vlaneseq
      %v703 = vshrl.u32 %v702, 7
      %v704 = vsub.s32 0, %v703
      %v705 = vrot.slane %v700, %v704
      %v706 = vlaneseq
      %v707 = vshrl.u32 %v706, 7
      %v708 = vsub.s32 1, %v707
      %v709 = vrot.slane %v700, %v708
      %v712 = vmul.f32 %v695, %v705
      %v713 = vmul.f32 %v699, %v709
      %v716 = vrot.slane %v712, 4
      %v717 = vrot.slane %v713, 4
      %720 = vst [vmem:[#allocation2 + $0x20] sm:$0xf0] %v716
      %721 = vst [vmem:[#allocation2 + $0x28] sm:$0xf0] %v717
      %722 = vrot.lane.b32.xlu0 %v573, 113
      %v723 = vpop.permute.xlu0 %722
      %724 = vrot.lane.b32.xlu0 %v574, 113
      %v725 = vpop.permute.xlu0 %724
      %v726 = vsel %vm415, %v723, %v725
      %v730 = vsel %vm415, %v725, %v723
      %v731 = vld [vmem:[%s421] sm:$0x3]
      %v733 = vlaneseq
      %v734 = vshrl.u32 %v733, 7
      %v735 = vsub.s32 0, %v734
      %v736 = vrot.slane %v731, %v735
      %v737 = vlaneseq
      %v738 = vshrl.u32 %v737, 7
      %v739 = vsub.s32 1, %v738
      %v740 = vrot.slane %v731, %v739
      %v743 = vmul.f32 %v726, %v736
      %v744 = vmul.f32 %v730, %v740
      %745 = vst [vmem:[#allocation2 + $0x30] sm:$0xf] %v743
      %746 = vst [vmem:[#allocation2 + $0x38] sm:$0xf] %v744
      %747 = vrot.lane.b32.xlu0 %v573, 112
      %v748 = vpop.permute.xlu0 %747
      %749 = vrot.lane.b32.xlu0 %v574, 112
      %v750 = vpop.permute.xlu0 %749
      %v751 = vsel %vm442, %v748, %v750
      %v755 = vsel %vm442, %v750, %v748
      %v756 = vld [vmem:[%s448] sm:$0x3]
      %v758 = vlaneseq
      %v759 = vshrl.u32 %v758, 7
      %v760 = vsub.s32 0, %v759
      %v761 = vrot.slane %v756, %v760
      %v762 = vlaneseq
      %v763 = vshrl.u32 %v762, 7
      %v764 = vsub.s32 1, %v763
      %v765 = vrot.slane %v756, %v764
      %v768 = vmul.f32 %v751, %v761
      %v769 = vmul.f32 %v755, %v765
      %v772 = vrot.slane %v768, 4
      %v773 = vrot.slane %v769, 4
      %776 = vst [vmem:[#allocation2 + $0x30] sm:$0xf0] %v772
      %777 = vst [vmem:[#allocation2 + $0x38] sm:$0xf0] %v773
      %778 = vrot.lane.b32.xlu0 %v573, 111
      %v779 = vpop.permute.xlu0 %778
      %780 = vrot.lane.b32.xlu0 %v574, 111
      %v781 = vpop.permute.xlu0 %780
      %v782 = vsel %vm475, %v779, %v781
      %v786 = vsel %vm475, %v781, %v779
      %v787 = vld [vmem:[%s481] sm:$0x3]
      %v789 = vlaneseq
      %v790 = vshrl.u32 %v789, 7
      %v791 = vsub.s32 0, %v790
      %v792 = vrot.slane %v787, %v791
      %v793 = vlaneseq
      %v794 = vshrl.u32 %v793, 7
      %v795 = vsub.s32 1, %v794
      %v796 = vrot.slane %v787, %v795
      %v799 = vmul.f32 %v782, %v792
      %v800 = vmul.f32 %v786, %v796
      %801 = vst [vmem:[#allocation2 + $0x40] sm:$0xf] %v799
      %802 = vst [vmem:[#allocation2 + $0x48] sm:$0xf] %v800
      %v803 = vld [vmem:[#allocation2] sm:$0xff]
      %v804 = vld [vmem:[#allocation2 + $0x8] sm:$0xff]
      %v805 = vld [vmem:[#allocation2 + $0x10] sm:$0xff]
      %v806 = vld [vmem:[#allocation2 + $0x18] sm:$0xff]
      %v807 = vld [vmem:[#allocation2 + $0x20] sm:$0xff]
      %v808 = vld [vmem:[#allocation2 + $0x28] sm:$0xff]
      %v809 = vld [vmem:[#allocation2 + $0x30] sm:$0xff]
      %v810 = vld [vmem:[#allocation2 + $0x38] sm:$0xff]
      %v811 = vld [vmem:[#allocation2 + $0x40] sm:$0xf]
      %v812 = vld [vmem:[#allocation2 + $0x48] sm:$0xf]
      %v813 = vpack.c.bf16 %v805, %v803
      %v814 = vpack.c.bf16 %v806, %v804
      %v815 = vpack.c.bf16 %v809, %v807
      %v816 = vpack.c.bf16 %v810, %v808
      %v817 = vpack.c.bf16 %v811, %v811
      %v818 = vpack.c.bf16 %v812, %v812
      %v819 = vld [vmem:[%s4] sm:$0x3]
      %v820 = vld [vmem:[%s5] sm:$0xf]
      %822 = vset.pattern.permute.xlu0 0
      %823 = vperm.xlu0 %822, %v820
      %v824 = vpop.permute.xlu0 %823
      %v827 = vsel %vm521, %v819, 0
      %v830 = vsel %vm525, %v817, 0
      %v833 = vsel %vm525, %v818, 0
      %835 = vmatprep.subr.bf16.mxu0 0
      %836 = vmatpush1.bf16.msra.mxu0 0
      %837 = vmatprep.subr.bf16.mxu0 0
      %838 = vmatpush1.bf16.msra.mxu0 0
      %839 = vmatprep.subr.bf16.mxu0 0
      %840 = vmatpush1.bf16.msra.mxu0 0
      %841 = vmatprep.subr.bf16.mxu0 0
      %842 = vmatpush1.bf16.msra.mxu0 0
      %843 = vmatprep.subr.bf16.mxu0 0
      %844 = vmatpush1.bf16.msra.mxu0 0
      %845 = vmatprep.subr.bf16.mxu0 %v833
      %846 = vmatpush1.bf16.msra.mxu0 %v830
      %847 = vmatprep.subr.bf16.mxu0 %v816
      %848 = vmatpush1.bf16.msra.mxu0 %v815
      %849 = vmatprep.subr.bf16.mxu0 %v814
      %850 = vmatpush1.bf16.msra.mxu0 %v813
      %851 = vmatprep.subr.bf16.mxu0 0
      %852 = vmatpush2.bf16.msra.mxu0 0
      %853 = vmatprep.subr.bf16.mxu0 0
      %854 = vmatpush2.bf16.msra.mxu0 0
      %855 = vmatprep.subr.bf16.mxu0 0
      %856 = vmatpush2.bf16.msra.mxu0 0
      %857 = vmatprep.subr.bf16.mxu0 0
      %858 = vmatpush2.bf16.msra.mxu0 0
      %859 = vmatprep.subr.bf16.mxu0 0
      %860 = vmatpush2.bf16.msra.mxu0 0
      %861 = vmatprep.subr.bf16.mxu0 0
      %862 = vmatpush2.bf16.msra.mxu0 0
      %863 = vmatprep.subr.bf16.mxu0 0
      %864 = vmatpush2.bf16.msra.mxu0 0
      %865 = vmatprep.subr.bf16.mxu0 0
      %866 = vmatpush2.bf16.msra.mxu0 0
      %867 = vmatprep.mubr.bf16.mxu0 0
      %868 = vmatmul.mubr.bf16.gmra.mxu0 %v827
      %v869 = vpop.f32.mrf.mxu0
      %v870 = vadd.f32 %v824, %v869
      %v871 = vpop.f32.mrf.mxu0
      %v872 = vadd.f32 %v824, %v871
      %v873 = vpop.f32.mrf.mxu0
      %v874 = vpop.f32.mrf.mxu0
      %875 = vdwg.mxu0
      %v876 = vadd.f32 %v870, %v253
      %v877 = vadd.f32 %v872, %v255
      %v878 = vmax.f32 %v876, 0.0
      %v879 = vmax.f32 %v877, 0.0
      %v882 = vcombine.low %v878, %v879
      %884 = vst [vmem:[%s251] sm:$0xff] %v882
      %p885 = scmp.lt.s32.totalorder %s17, 1
      %s886 = scalar_select %p885, %s17, 1
      %s887 = smul.addr %s886, 2
      %s888 = smul.addr %s887, 4
      %s889 = scalar_lea.vmem %s6, %s888
      // Predicated region
      $region45: #{basic_block_forward.1} parent=43 // pred_check
        %p890 = pneg %p166
      $region46: #{basic_block_forward.1} parent=43 // pred_check_branch
        %892 = sbr.rel (%p890) target = $region48
      $region47: #{basic_block_forward.1} parent=43 // pred_region
        _
      $region48: #{basic_block_forward.1} parent=43 // pred_fallthru
        _
    $region44: #{basic_block_forward.1} parent=5 // pred_fallthru
      _
    %p893 = scmp.le.s32.totalorder 2, %s12
    // Predicated region
    $region49: #{basic_block_forward.1} parent=5 // pred_check
      %p894 = pneg %p893
    $region50: #{basic_block_forward.1} parent=5 // pred_check_branch
      %896 = sbr.rel (%p894) target = $region52
    $region51: #{basic_block_forward.1} parent=5 // pred_region
      %s897 = ssub.s32 %s12, 2
      // Predicated region
      $region53: #{basic_block_forward.1} parent=51 // pred_check
        %p898 = pneg %p172
      $region54: #{basic_block_forward.1} parent=51 // pred_check_branch
        %900 = sbr.rel (%p898) target = $region56
      $region55: #{basic_block_forward.1} parent=51 // pred_region
        %p901 = scmp.lt.s32.totalorder %s18, 1
        %s902 = scalar_select %p901, %s18, 1
        %s903 = smul.addr %s902, 2
        %s904 = smul.addr %s903, 4
        %s905 = scalar_lea.vmem %s6, %s904
      $region56: #{basic_block_forward.1} parent=51 // pred_fallthru
        _
    $region52: #{basic_block_forward.1} parent=5 // pred_fallthru
      _
  $region6: #{basic_block_forward.1} parent=0 // loop_footer
    %s16 = sadd.s32 1, %s12
  $region7: #{basic_block_forward.1} parent=0 // loop_footer_branch
    %11 = sbr.rel target = $region3
  $region8: #{basic_block_forward.1} parent=0 // loop_exit
    _

</llo_original>
